<compile_context>
chip_gen: v7x
topology: tpu7x:2x2x1
jax: 0.10.0
libtpu: 0.0.40
codegen_flags: <defaults>
</compile_context>

<pallas_src>
import functools

import jax
import jax.numpy as jnp
from jax.experimental import pallas as pl
from jax.experimental.pallas import tpu as pltpu

_LANE = 128


def _round_up(x, m):
    return ((x + m - 1) // m) * m


def _iclassifier_kernel(feats_ref, w_ref, b_ref, c_ref):
    # feats_ref : [TM, ndim] (f32 or bf16)   w_ref : [ndim, NPAD] bf16
    # b_ref     : [1, NPAD] f32              c_ref : [TM, NPAD] f32 (lane-dense)
    a = feats_ref[...].astype(w_ref.dtype)          # bf16 -> single-pass MXU
    c = jnp.dot(a, w_ref[...], preferred_element_type=jnp.float32)
    c_ref[...] = (c + b_ref[...]).astype(c_ref.dtype)


def prepare_iclassifier_params(weight, bias, *, compute_dtype=jnp.bfloat16):
    """One-time parameter prep (run OUTSIDE the jitted forward).

    weight : [n_classes, ndim] (PyTorch nn.Linear layout)
    bias   : [n_classes]
    Returns (w_pad [ndim, NPAD] compute_dtype, b_pad [1, NPAD] f32, n_classes).
    """
    n_classes, ndim = weight.shape
    npad = _round_up(n_classes, _LANE)
    if npad > _LANE:                        # v6e/v7x MXU is 256 wide in N
        npad = _round_up(npad, 2 * _LANE)
    w_pad = jnp.zeros((ndim, npad), compute_dtype).at[:, :n_classes].set(
        weight.T.astype(compute_dtype))
    b_pad = jnp.zeros((1, npad), jnp.float32).at[:, :n_classes].set(
        bias.astype(jnp.float32).reshape(1, n_classes))
    return w_pad, b_pad, n_classes


def _pick_row_tile(n, ndim, npad, feats_bytes, out_bytes, w_bytes):
    """Row tile TM + vmem_limit derived from a per-generation VMEM budget."""
    try:
        vmem_cap = int(pltpu.get_tpu_info().vmem_capacity_bytes)
    except Exception:  # pragma: no cover - fall back to the smallest (v7x) VMEM
        vmem_cap = 64 * 1024 * 1024
    # ~70% of physical VMEM, capped so v5e/v6e (128 MiB) don't over-commit.
    budget = min(int(vmem_cap * 0.7), 96 * 1024 * 1024)
    # Resident padded W + bias (worst case: both pipeline buffers allocated).
    resident = 2 * (ndim * npad * w_bytes + npad * 4)
    # Double-buffered streamed feats tile + double-buffered output tile, per row.
    per_row = 2 * (ndim * feats_bytes + npad * out_bytes)
    tm_cap = max((budget - resident) // per_row, _LANE)
    tm_cap = min(tm_cap, 2048)

    if n <= 256:
        tm = n                                              # single step
    else:
        # At least 2 grid steps so both v7x TensorCores get work.
        tm = min(tm_cap, _round_up(pl.cdiv(n, 2), _LANE))
        tm = max((tm // _LANE) * _LANE, _LANE)

    need = resident + 2 * tm * (ndim * feats_bytes + npad * out_bytes)
    vmem_limit = int(min(max(budget, need + need // 4), vmem_cap * 15 // 16))
    vmem_limit = max(vmem_limit, 32 * 1024 * 1024)
    return tm, vmem_limit


@functools.partial(jax.jit, static_argnames=("n_classes", "slice_logits"))
def iclassifier_forward(feats, w_pad, b_pad, *, n_classes, slice_logits=True):
    """feats: [N, ...] -> (feats_flat [N, ndim], logits [N, n_classes])."""
    n = feats.shape[0]
    feats_flat = feats.reshape(n, -1)          # the .view(): metadata only
    ndim = feats_flat.shape[1]
    npad = w_pad.shape[1]

    feats_bytes = jnp.dtype(feats_flat.dtype).itemsize
    w_bytes = jnp.dtype(w_pad.dtype).itemsize
    out_bytes = 4
    tm, vmem_limit = _pick_row_tile(n, ndim, npad, feats_bytes, out_bytes, w_bytes)

    grid = (pl.cdiv(n, tm),)
    cost = pl.CostEstimate(
        flops=2 * n * ndim * npad,
        transcendentals=0,
        bytes_accessed=(n * ndim * feats_bytes + ndim * npad * w_bytes
                        + n * npad * out_bytes + npad * 4),
    )

    logits_pad = pl.pallas_call(
        _iclassifier_kernel,
        out_shape=jax.ShapeDtypeStruct((n, npad), jnp.float32),
        grid=grid,
        in_specs=[
            pl.BlockSpec((tm, ndim), lambda i: (i, 0)),     # streamed feats rows
            pl.BlockSpec((ndim, npad), lambda i: (0, 0)),   # resident padded W (bf16)
            pl.BlockSpec((1, npad), lambda i: (0, 0)),      # resident padded bias
        ],
        out_specs=pl.BlockSpec((tm, npad), lambda i: (i, 0)),  # lane-dense output
        compiler_params=pltpu.CompilerParams(
            dimension_semantics=("parallel",),
            vmem_limit_bytes=vmem_limit,
        ),
        cost_estimate=cost,
    )(feats_flat, w_pad, b_pad)

    if slice_logits:
        return feats_flat, logits_pad[:, :n_classes]
    # Defer the slice to the consumer (saves an N*NPAD re-read + N*C write).
    return feats_flat, logits_pad


def init_linear_params(key, ndim, n_classes):
    # Deterministic init mirroring nn.Linear's default U(-1/sqrt(ndim), 1/sqrt(ndim)).
    kw, kb = jax.random.split(key)
    bound = 1.0 / jnp.sqrt(jnp.float32(ndim))
    weight = jax.random.uniform(kw, (n_classes, ndim), jnp.float32, -bound, bound)
    bias = jax.random.uniform(kb, (n_classes,), jnp.float32, -bound, bound)
    return weight, bias


if __name__ == "__main__":
    key = jax.random.PRNGKey(0)
    k_feat, k_par = jax.random.split(key)

    # Small shapes: N=8 instances, each with features [4, 32] -> ndim=128
    # (lane-aligned K), 4 classes.
    N, n_classes = 8, 4
    feats = jax.random.normal(k_feat, (N, 4, 32), dtype=jnp.float32)
    ndim = 4 * 32

    weight, bias = init_linear_params(k_par, ndim, n_classes)   # [n_classes, ndim]
    w_pad, b_pad, n_cls = prepare_iclassifier_params(weight, bias)  # one-time pad/cast

    feats_flat, logits = iclassifier_forward(feats, w_pad, b_pad, n_classes=n_cls)
    jax.block_until_ready((feats_flat, logits))

    # Reference check against plain JAX (f32).
    ref_flat = feats.reshape(N, -1)
    ref_logits = ref_flat @ weight.T + bias
    assert feats_flat.shape == (N, ndim) and logits.shape == (N, n_classes)
    assert jnp.allclose(feats_flat, ref_flat)
    # bf16 compute with f32 accumulation: relaxed tolerance vs f32 reference.
    assert jnp.allclose(logits, ref_logits, rtol=2e-2, atol=2e-2)

    print("KERNEL_OK")
</pallas_src>

<mosaic_0001>
module attributes {stable_mosaic.version = 11 : i64} {
  func.func @_iclassifier_kernel(%arg0: i32, %arg1: memref<8x128xf32, #tpu.memory_space<vmem>>, %arg2: memref<128x128xbf16, #tpu.memory_space<vmem>>, %arg3: memref<1x128xf32, #tpu.memory_space<vmem>>, %arg4: memref<8x128xf32, #tpu.memory_space<vmem>>) attributes {dimension_semantics = [#tpu.dimension_semantics<parallel>], iteration_bounds = array<i64: 1>, scalar_prefetch = 0 : i64, scratch_operands = 0 : i64, tpu.core_type = #tpu.core_type<tc>, window_params = [{transform_indices = @transform_0, window_bounds = array<i64: 8, 128>}, {pipeline_mode = #tpu.pipeline_mode<synchronous>, transform_indices = @transform_1, window_bounds = array<i64: 128, 128>}, {pipeline_mode = #tpu.pipeline_mode<synchronous>, transform_indices = @transform_2, window_bounds = array<i64: 1, 128>}, {transform_indices = @transform_3, window_bounds = array<i64: 8, 128>}]} {
    %c0 = arith.constant 0 : index
    %c0_0 = arith.constant 0 : index
    %0 = vector.load %arg1[%c0, %c0_0] : memref<8x128xf32, #tpu.memory_space<vmem>>, vector<8x128xf32>
    %1 = arith.truncf %0 : vector<8x128xf32> to vector<8x128xbf16>
    %c0_1 = arith.constant 0 : index
    %c0_2 = arith.constant 0 : index
    %2 = vector.load %arg2[%c0_1, %c0_2] : memref<128x128xbf16, #tpu.memory_space<vmem>>, vector<128x128xbf16>
    %cst = arith.constant dense<0.000000e+00> : vector<8x128xf32>
    %3 = tpu.matmul %1, %2, %cst {dimension_numbers = #tpu.dot_dimension_numbers<[1], [0], [0], [1], [0, 0, 1, 1], [], []>} : vector<8x128xbf16>, vector<128x128xbf16>, vector<8x128xf32> -> vector<8x128xf32>
    %c0_3 = arith.constant 0 : index
    %c0_4 = arith.constant 0 : index
    %4 = vector.load %arg3[%c0_3, %c0_4] : memref<1x128xf32, #tpu.memory_space<vmem>>, vector<1x128xf32>
    %5 = vector.broadcast %4 : vector<1x128xf32> to vector<8x128xf32>
    %6 = arith.addf %3, %5 : vector<8x128xf32>
    %c0_5 = arith.constant 0 : index
    %c0_6 = arith.constant 0 : index
    %7 = vector.load %arg4[%c0_5, %c0_6] : memref<8x128xf32, #tpu.memory_space<vmem>>, vector<8x128xf32>
    tpu.vector_store %arg4[%c0_5, %c0_6], %6 {strides = array<i32>} : memref<8x128xf32, #tpu.memory_space<vmem>>, vector<8x128xf32>,
    return
  }
  func.func @transform_0(%arg0: i32) -> (i32, i32) {
    %c0_i32 = arith.constant 0 : i32
    %c0_i32_0 = arith.constant 0 : i32
    return %arg0, %c0_i32 : i32, i32
  }
  func.func @transform_1(%arg0: i32) -> (i32, i32) {
    %c0_i32 = arith.constant 0 : i32
    %c0_i32_0 = arith.constant 0 : i32
    %c0_i32_1 = arith.constant 0 : i32
    return %c0_i32, %c0_i32_0 : i32, i32
  }
  func.func @transform_2(%arg0: i32) -> (i32, i32) {
    %c0_i32 = arith.constant 0 : i32
    %c0_i32_0 = arith.constant 0 : i32
    %c0_i32_1 = arith.constant 0 : i32
    return %c0_i32, %c0_i32_0 : i32, i32
  }
  func.func @transform_3(%arg0: i32) -> (i32, i32) {
    %c0_i32 = arith.constant 0 : i32
    %c0_i32_0 = arith.constant 0 : i32
    return %arg0, %c0_i32 : i32, i32
  }
}

</mosaic_0001>

<llo_original>
// kernel: iclassifier_forward.1
$region0: #{iclassifier_forward.1}
  #allocation0 [shape = 'u32[]', space=smem, size = 0x4, offset = 0x4, fixed_abs, tag = 'smem constant byte address 0x4 - core index']
  #allocation1 [shape = 'u32[144,128]{1,0:T(1,128)}', space=vmem, size = 0x12000, scoped, tag = 'internal scratch']
  %s0 = inlined_call_operand.vmem [shape: f32[8,128], index: 0, kind: input, shape index: {}]
  %s1 = inlined_call_operand.hbm [shape: bf16[128,128], index: 1, kind: input, shape index: {}]
  %s2 = inlined_call_operand.vmem [shape: f32[1,128], index: 2, kind: input, shape index: {}]
  %s3 = inlined_call_operand.vmem [shape: f32[8,128], index: 3, kind: output, shape index: {}]
  %s4 = sld [smem:[#allocation0]]
  $region26: #{iclassifier_forward.1} parent=0
    _
  %s6 = ssub.s32 1, %s4
  %s7 = scalar_select 0, %s6, %s4
  $region1: #{iclassifier_forward.1} parent=0
    #allocation2 [shape = 'u8[32768]{0}', space=vmem, size = 0x8000, scoped, tag = 'input window, operand 1, single buffered']
    #allocation3 [shape = 's32[1]{0}', space=sflag, size = 0x4, scoped, tag = 'scoped memory for iclassifier_forward.1']
    %8 = vsyncpa [#allocation3], 0
    // Predicated region
    $region2: #{iclassifier_forward.1} parent=1 // pred_check
      _
    $region3: #{iclassifier_forward.1} parent=1 // pred_check_branch
      %10 = sbr.rel (0) target = $region5
    $region4: #{iclassifier_forward.1} parent=1 // pred_region
      _
    $region5: #{iclassifier_forward.1} parent=1 // pred_fallthru
      _
    // Predicated region
    $region6: #{iclassifier_forward.1} parent=1 // pred_check
      _
    $region7: #{iclassifier_forward.1} parent=1 // pred_check_branch
      %12 = sbr.rel (0) target = $region9
    $region8: #{iclassifier_forward.1} parent=1 // pred_region
      %s14 = ssub.s32 1024, 1024
      %15 = vsyncadd [#allocation3], %s14
      %s16 = sshll.u32 [#allocation2], 4
      %s17 = int_to_ptr.vmem [resolvable:$true] %s16
      %22 = dma.hbm_to_vmem [thread:$0]  %s1, 1024, %s17, [#allocation3], 64, 64, 4
    $region9: #{iclassifier_forward.1} parent=1 // pred_fallthru
      _
    // Predicated region
    $region10: #{iclassifier_forward.1} parent=1 // pred_check
      _
    $region11: #{iclassifier_forward.1} parent=1 // pred_check_branch
      %24 = sbr.rel (0) target = $region13
    $region12: #{iclassifier_forward.1} parent=1 // pred_region
      _
    $region13: #{iclassifier_forward.1} parent=1 // pred_fallthru
      _
    // Predicated region
    $region14: #{iclassifier_forward.1} parent=1 // pred_check
      _
    $region15: #{iclassifier_forward.1} parent=1 // pred_check_branch
      %26 = sbr.rel (0) target = $region17
    $region16: #{iclassifier_forward.1} parent=1 // pred_region
      %27 = dma.done [#allocation3], 1024
    $region17: #{iclassifier_forward.1} parent=1 // pred_fallthru
      _
    %v29 = vld [vmem:[%s0] sm:$0xff]
    %v30 = vpack.c.bf16 %v29, %v29
    %v31 = vld [vmem:[#allocation2] sm:$0xf]
    %v32 = vld [vmem:[#allocation2 + $0x4] sm:$0xf]
    %v33 = vld [vmem:[#allocation2 + $0x8] sm:$0xf]
    %v34 = vld [vmem:[#allocation2 + $0xc] sm:$0xf]
    %v35 = vld [vmem:[#allocation2 + $0x10] sm:$0xf]
    %v36 = vld [vmem:[#allocation2 + $0x14] sm:$0xf]
    %v37 = vld [vmem:[#allocation2 + $0x18] sm:$0xf]
    %v38 = vld [vmem:[#allocation2 + $0x1c] sm:$0xf]
    %v39 = vld [vmem:[#allocation2 + $0x20] sm:$0xf]
    %v40 = vld [vmem:[#allocation2 + $0x24] sm:$0xf]
    %v41 = vld [vmem:[#allocation2 + $0x28] sm:$0xf]
    %v42 = vld [vmem:[#allocation2 + $0x2c] sm:$0xf]
    %v43 = vld [vmem:[#allocation2 + $0x30] sm:$0xf]
    %v44 = vld [vmem:[#allocation2 + $0x34] sm:$0xf]
    %v45 = vld [vmem:[#allocation2 + $0x38] sm:$0xf]
    %v46 = vld [vmem:[#allocation2 + $0x3c] sm:$0xf]
    %v47 = vld [vmem:[%s2] sm:$0x1]
    %v49 = vlaneseq
    %v50 = vshrl.u32 %v49, 7
    %v51 = vsub.s32 0, %v50
    %v52 = vrot.slane %v47, %v51
    %v70 = vunpack.c.l.b16 %v31
    %v71 = vunpack.c.l.b16 %v32
    %v72 = vunpack.c.l.b16 %v33
    %v73 = vunpack.c.l.b16 %v34
    %v74 = vunpack.c.l.b16 %v35
    %v75 = vunpack.c.l.b16 %v36
    %v76 = vunpack.c.l.b16 %v37
    %v77 = vunpack.c.l.b16 %v38
    %v78 = vunpack.c.l.b16 %v39
    %v79 = vunpack.c.l.b16 %v40
    %v80 = vunpack.c.l.b16 %v41
    %v81 = vunpack.c.l.b16 %v42
    %v82 = vunpack.c.l.b16 %v43
    %v83 = vunpack.c.l.b16 %v44
    %v84 = vunpack.c.l.b16 %v45
    %v85 = vunpack.c.l.b16 %v46
    %v86 = vpack.c.b16 %v71, %v70
    %v87 = vpack.c.b16 %v73, %v72
    %v88 = vpack.c.b16 %v75, %v74
    %v89 = vpack.c.b16 %v77, %v76
    %v90 = vpack.c.b16 %v79, %v78
    %v91 = vpack.c.b16 %v81, %v80
    %v92 = vpack.c.b16 %v83, %v82
    %v93 = vpack.c.b16 %v85, %v84
    %102 = vmatprep.subr.bf16.mxu0 0
    %103 = vmatpush1.bf16.msra.mxu0 %v86
    %104 = vmatprep.subr.bf16.mxu0 0
    %105 = vmatpush1.bf16.msra.mxu0 %v87
    %106 = vmatprep.subr.bf16.mxu0 0
    %107 = vmatpush1.bf16.msra.mxu0 %v88
    %108 = vmatprep.subr.bf16.mxu0 0
    %109 = vmatpush1.bf16.msra.mxu0 %v89
    %110 = vmatprep.subr.bf16.mxu0 0
    %111 = vmatpush1.bf16.msra.mxu0 %v90
    %112 = vmatprep.subr.bf16.mxu0 0
    %113 = vmatpush1.bf16.msra.mxu0 %v91
    %114 = vmatprep.subr.bf16.mxu0 0
    %115 = vmatpush1.bf16.msra.mxu0 %v92
    %116 = vmatprep.subr.bf16.mxu0 0
    %117 = vmatpush1.bf16.msra.mxu0 %v93
    %118 = vmatprep.subr.bf16.mxu0 0
    %119 = vmatpush1.bf16.msra.mxu0 0
    %120 = vmatprep.subr.bf16.mxu0 0
    %121 = vmatpush1.bf16.msra.mxu0 0
    %122 = vmatprep.subr.bf16.mxu0 0
    %123 = vmatpush1.bf16.msra.mxu0 0
    %124 = vmatprep.subr.bf16.mxu0 0
    %125 = vmatpush1.bf16.msra.mxu0 0
    %126 = vmatprep.subr.bf16.mxu0 0
    %127 = vmatpush1.bf16.msra.mxu0 0
    %128 = vmatprep.subr.bf16.mxu0 0
    %129 = vmatpush1.bf16.msra.mxu0 0
    %130 = vmatprep.subr.bf16.mxu0 0
    %131 = vmatpush1.bf16.msra.mxu0 0
    %132 = vmatprep.subr.bf16.mxu0 0
    %133 = vmatpush1.bf16.msra.mxu0 0
    %134 = vmatprep.mubr.bf16.mxu0 0
    %135 = vmatmul.mubr.bf16.gmra.mrb[0].mxu0 %v30
    %v136 = vpop.f32.mrb[0].mxu0
    %v137 = vadd.f32 %v52, %v136
    %v138 = vpop.f32.mrb[0].mxu0
    %v139 = vpop.f32.mrb[0].mxu0
    %v140 = vpop.f32.mrb[0].mxu0
    %141 = vdwg.mxu0
    %142 = vst [vmem:[%s3] sm:$0xff] %v137
    // Predicated region
    $region18: #{iclassifier_forward.1} parent=1 // pred_check
      _
    $region19: #{iclassifier_forward.1} parent=1 // pred_check_branch
      %144 = sbr.rel (0) target = $region21
    $region20: #{iclassifier_forward.1} parent=1 // pred_region
      _
    $region21: #{iclassifier_forward.1} parent=1 // pred_fallthru
      _
    // Predicated region
    $region22: #{iclassifier_forward.1} parent=1 // pred_check
      _
    $region23: #{iclassifier_forward.1} parent=1 // pred_check_branch
      %146 = sbr.rel (0) target = $region25
    $region24: #{iclassifier_forward.1} parent=1 // pred_region
      _
    $region25: #{iclassifier_forward.1} parent=1 // pred_fallthru
      _
    %147 = vsyncpa [#allocation3], 1

</llo_original>
